<compile_context>
chip_gen: v7x
topology: tpu7x:2x2x1
jax: 0.10.0
libtpu: 0.0.40
codegen_flags: <defaults>
</compile_context>

<pallas_src>
import jax
import jax.numpy as jnp
import numpy as np
from jax.experimental import pallas as pl
from jax.experimental.pallas import tpu as pltpu

PAD = 128        # lane-padded hidden width (>= 20)
HID = 20         # true hidden width
ROW_TILE = 1024  # rows per grid step when N exceeds one tile

# Stash rows inside the weight slab (all >= HID, sublane-aligned).
W1_ROW = 24   # w1 as a (1,128) row (cols 0..19 valid, rest 0)
B1_ROW = 32   # b1
B2_ROW = 40   # b2 ; col 20 holds 1.0 -> "bias lane" for b3
W3_ROW = 48   # w3^T as a row ; col 20 holds b3


def _mlp_kernel(x_ref, slab_ref, o_ref):
    # x_ref: (R, 1); slab_ref: (PAD, PAD); o_ref: (R, 1)
    x = x_ref[...]                                   # (R, 1)
    w1 = slab_ref[W1_ROW:W1_ROW + 1, :]              # (1, PAD)
    b1 = slab_ref[B1_ROW:B1_ROW + 1, :]              # (1, PAD)
    b2 = slab_ref[B2_ROW:B2_ROW + 1, :]              # (1, PAD), col 20 == 1.0
    w3 = slab_ref[W3_ROW:W3_ROW + 1, :]              # (1, PAD), col 20 == b3

    # Layer 1: fan_in == 1 -> outer product on the VPU.
    h1 = jnp.maximum(x * w1 + b1, 0.0)               # (R, PAD); cols >= 20 are 0

    # Layer 2: single MXU matmul against the full slab.  Because h1[:,20:] == 0,
    # the stash rows (>= 20) of the slab contribute nothing -> exact.
    h2 = jnp.dot(h1, slab_ref[...], preferred_element_type=jnp.float32) + b2
    h2 = jnp.maximum(h2, 0.0)                        # (R, PAD); col 20 == 1.0

    # Layer 3: fan_out == 1 -> VPU multiply + lane reduction (XLU).
    # w3 col 20 holds b3 and h2 col 20 == 1, so the sum already includes b3.
    o_ref[...] = jnp.sum(h2 * w3, axis=-1, keepdims=True)


def prepare_params(params):
    """One-time packing of all weights/biases into a single (PAD, PAD) slab.

    Invariant required for exactness: columns >= HID of the w1/b1 stash rows
    stay exactly zero, so h1[:, HID:] == 0 and slab rows >= HID never affect
    the layer-2 matmul."""
    (w1, b1), (w2, b2), (w3, b3) = params
    slab = np.zeros((PAD, PAD), np.float32)
    slab[:w2.shape[0], :w2.shape[1]] = np.asarray(w2, np.float32)      # 20x20 w2
    slab[W1_ROW, :w1.shape[1]] = np.asarray(w1, np.float32)[0]         # (1,20) row
    slab[B1_ROW, :b1.shape[0]] = np.asarray(b1, np.float32)            # (20,)
    slab[B2_ROW, :b2.shape[0]] = np.asarray(b2, np.float32)            # (20,)
    slab[B2_ROW, HID] = 1.0                                            # bias lane
    slab[W3_ROW, :w3.shape[0]] = np.asarray(w3, np.float32)[:, 0]      # (20,1) col
    slab[W3_ROW, HID] = float(np.asarray(b3, np.float32).reshape(-1)[0])  # b3
    return jnp.asarray(slab)


def mlp_forward(x, slab, row_tile=ROW_TILE):
    """x: (N, 1) float32. Returns (N, 1) float32 = Linear/ReLU/Linear/ReLU/Linear."""
    n = x.shape[0]
    x = x.astype(jnp.float32)

    if n <= row_tile:
        # Single-block fast path: full-array blocks (exempt from (8,128) rule),
        # no wrapper pad/slice, one grid step on one TensorCore.
        x_in, n_pad, tile = x, n, n
        grid = (1,)
        semantics = ("arbitrary",)
    else:
        n_pad = pl.cdiv(n, row_tile) * row_tile
        x_in = jnp.zeros((n_pad, 1), jnp.float32).at[:n, :].set(x)
        tile = row_tile
        grid = (n_pad // row_tile,)
        semantics = ("parallel",)   # independent row blocks -> shard across TCs

    out = pl.pallas_call(
        _mlp_kernel,
        out_shape=jax.ShapeDtypeStruct((n_pad, 1), jnp.float32),
        grid_spec=pltpu.PrefetchScalarGridSpec(
            num_scalar_prefetch=0,
            grid=grid,
            in_specs=[
                pl.BlockSpec((tile, 1), lambda i: (i, 0)),     # narrow x
                pl.BlockSpec((PAD, PAD), lambda i: (0, 0)),    # single param slab
            ],
            out_specs=pl.BlockSpec((tile, 1), lambda i: (i, 0)),  # narrow out
        ),
        compiler_params=pltpu.CompilerParams(dimension_semantics=semantics),
    )(x_in, slab)

    return out if n_pad == n else out[:n, :]


def init_params(key):
    """Deterministic init mimicking torch.nn.Linear default:
    U(-1/sqrt(fan_in), 1/sqrt(fan_in)). Weights stored as
    (in_features, out_features) so forward is x @ W + b."""
    dims = [(1, 20), (20, 20), (20, 1)]
    params = []
    for (fan_in, fan_out) in dims:
        key, kw, kb = jax.random.split(key, 3)
        bound = 1.0 / np.sqrt(fan_in)
        w = jax.random.uniform(kw, (fan_in, fan_out), jnp.float32, -bound, bound)
        b = jax.random.uniform(kb, (fan_out,), jnp.float32, -bound, bound)
        params.append((w, b))
    return params


def mlp_reference(x, params):
    h = x.astype(jnp.float32)
    (w1, b1), (w2, b2), (w3, b3) = params
    h = jnp.maximum(h @ w1 + b1, 0.0)
    h = jnp.maximum(h @ w2 + b2, 0.0)
    return h @ w3 + b3


if __name__ == "__main__":
    key = jax.random.PRNGKey(0)
    params = init_params(key)
    slab = prepare_params(params)   # one-time packing, outside the hot path

    # Same input convention as the original script: 200 points in [-1, 1], shape (200, 1)
    x = jnp.linspace(-1.0, 1.0, 200, dtype=jnp.float32).reshape(200, 1)

    out = mlp_forward(x, slab)
    out = jax.block_until_ready(out)

    ref = mlp_reference(x, params)
    np.testing.assert_allclose(np.asarray(out), np.asarray(ref), rtol=1e-5, atol=1e-5)

    assert out.shape == (200, 1)
    print("KERNEL_OK")
</pallas_src>

<mosaic_0001>
module attributes {stable_mosaic.version = 11 : i64} {
  func.func @_mlp_kernel(%arg0: i32, %arg1: memref<200x1xf32, #tpu.memory_space<vmem>>, %arg2: memref<128x128xf32, #tpu.memory_space<vmem>>, %arg3: memref<200x1xf32, #tpu.memory_space<vmem>>) attributes {dimension_semantics = [#tpu.dimension_semantics<arbitrary>], iteration_bounds = array<i64: 1>, scalar_prefetch = 0 : i64, scratch_operands = 0 : i64, tpu.core_type = #tpu.core_type<tc>, window_params = [{transform_indices = @transform_0, window_bounds = array<i64: 200, 1>}, {pipeline_mode = #tpu.pipeline_mode<synchronous>, transform_indices = @transform_1, window_bounds = array<i64: 128, 128>}, {transform_indices = @transform_2, window_bounds = array<i64: 200, 1>}]} {
    %c0 = arith.constant 0 : index
    %c0_0 = arith.constant 0 : index
    %0 = vector.load %arg1[%c0, %c0_0] : memref<200x1xf32, #tpu.memory_space<vmem>>, vector<200x1xf32>
    %c24 = arith.constant 24 : index
    %c0_1 = arith.constant 0 : index
    %1 = vector.load %arg2[%c24, %c0_1] : memref<128x128xf32, #tpu.memory_space<vmem>>, vector<1x128xf32>
    %c32 = arith.constant 32 : index
    %c0_2 = arith.constant 0 : index
    %2 = vector.load %arg2[%c32, %c0_2] : memref<128x128xf32, #tpu.memory_space<vmem>>, vector<1x128xf32>
    %c40 = arith.constant 40 : index
    %c0_3 = arith.constant 0 : index
    %3 = vector.load %arg2[%c40, %c0_3] : memref<128x128xf32, #tpu.memory_space<vmem>>, vector<1x128xf32>
    %c48 = arith.constant 48 : index
    %c0_4 = arith.constant 0 : index
    %4 = vector.load %arg2[%c48, %c0_4] : memref<128x128xf32, #tpu.memory_space<vmem>>, vector<1x128xf32>
    %5 = vector.broadcast %0 : vector<200x1xf32> to vector<200x128xf32>
    %6 = vector.broadcast %1 : vector<1x128xf32> to vector<200x128xf32>
    %7 = arith.mulf %5, %6 : vector<200x128xf32>
    %8 = vector.broadcast %2 : vector<1x128xf32> to vector<200x128xf32>
    %9 = arith.addf %7, %8 : vector<200x128xf32>
    %cst = arith.constant 0.000000e+00 : f32
    %10 = vector.broadcast %cst : f32 to vector<200x128xf32>
    %11 = arith.maximumf %9, %10 : vector<200x128xf32>
    %c0_5 = arith.constant 0 : index
    %c0_6 = arith.constant 0 : index
    %12 = vector.load %arg2[%c0_5, %c0_6] : memref<128x128xf32, #tpu.memory_space<vmem>>, vector<128x128xf32>
    %cst_7 = arith.constant dense<0.000000e+00> : vector<200x128xf32>
    %13 = tpu.matmul %11, %12, %cst_7 {dimension_numbers = #tpu.dot_dimension_numbers<[1], [0], [0], [1], [0, 0, 1, 1], [], []>} : vector<200x128xf32>, vector<128x128xf32>, vector<200x128xf32> -> vector<200x128xf32>
    %14 = vector.broadcast %3 : vector<1x128xf32> to vector<200x128xf32>
    %15 = arith.addf %13, %14 : vector<200x128xf32>
    %cst_8 = arith.constant 0.000000e+00 : f32
    %16 = vector.broadcast %cst_8 : f32 to vector<200x128xf32>
    %17 = arith.maximumf %15, %16 : vector<200x128xf32>
    %18 = vector.broadcast %4 : vector<1x128xf32> to vector<200x128xf32>
    %19 = arith.mulf %17, %18 : vector<200x128xf32>
    %cst_9 = arith.constant dense<0.000000e+00> : vector<200xf32>
    %20 = vector.multi_reduction <add>, %19, %cst_9 [1] : vector<200x128xf32> to vector<200xf32>
    %21 = vector.shape_cast %20 : vector<200xf32> to vector<200x1xf32>
    %c0_10 = arith.constant 0 : index
    %c0_11 = arith.constant 0 : index
    %22 = vector.load %arg3[%c0_10, %c0_11] : memref<200x1xf32, #tpu.memory_space<vmem>>, vector<200x1xf32>
    tpu.vector_store %arg3[%c0_10, %c0_11], %21 {strides = array<i32>} : memref<200x1xf32, #tpu.memory_space<vmem>>, vector<200x1xf32>,
    return
  }
  func.func @transform_0(%arg0: i32) -> (i32, i32) {
    %c0_i32 = arith.constant 0 : i32
    %c0_i32_0 = arith.constant 0 : i32
    return %arg0, %c0_i32 : i32, i32
  }
  func.func @transform_1(%arg0: i32) -> (i32, i32) {
    %c0_i32 = arith.constant 0 : i32
    %c0_i32_0 = arith.constant 0 : i32
    %c0_i32_1 = arith.constant 0 : i32
    return %c0_i32, %c0_i32_0 : i32, i32
  }
  func.func @transform_2(%arg0: i32) -> (i32, i32) {
    %c0_i32 = arith.constant 0 : i32
    %c0_i32_0 = arith.constant 0 : i32
    return %arg0, %c0_i32 : i32, i32
  }
}

</mosaic_0001>

<llo_original>
// kernel: tpu_custom_call.1
$region0: #{tpu_custom_call.1}
  #allocation0 [shape = 'u32[]', space=smem, size = 0x4, offset = 0x4, fixed_abs, tag = 'smem constant byte address 0x4 - core index']
  #allocation1 [shape = 'u32[144,128]{1,0:T(1,128)}', space=vmem, size = 0x12000, scoped, tag = 'internal scratch']
  %s0 = inlined_call_operand.vmem [shape: f32[200,1], index: 0, kind: input, shape index: {}]
  %s1 = inlined_call_operand.vmem [shape: f32[128,128], index: 1, kind: input, shape index: {}]
  %s2 = inlined_call_operand.vmem [shape: f32[200,1], index: 2, kind: output, shape index: {}]
  %s3 = sld [smem:[#allocation0]]
  $region18: #{tpu_custom_call.1} parent=0
    _
  %s5 = ssub.s32 1, %s3
  %s6 = scalar_select 0, %s5, %s3
  // Predicated region
  $region2: #{tpu_custom_call.1} parent=0 // pred_check
    _
  $region3: #{tpu_custom_call.1} parent=0 // pred_check_branch
    %8 = sbr.rel (0) target = $region5
  $region4: #{tpu_custom_call.1} parent=0 // pred_region
    _
  $region5: #{tpu_custom_call.1} parent=0 // pred_fallthru
    _
  // Predicated region
  $region6: #{tpu_custom_call.1} parent=0 // pred_check
    _
  $region7: #{tpu_custom_call.1} parent=0 // pred_check_branch
    %10 = sbr.rel (0) target = $region9
  $region8: #{tpu_custom_call.1} parent=0 // pred_region
    _
  $region9: #{tpu_custom_call.1} parent=0 // pred_fallthru
    _
  %v11 = vld [vmem:[%s0] sm:$0xff]
  %v12 = vld [vmem:[%s0 + $0x8] sm:$0xff]
  %v13 = vld [vmem:[%s0 + $0x10] sm:$0xff]
  %v14 = vld [vmem:[%s0 + $0x18] sm:$0xff]
  %v15 = vld [vmem:[%s0 + $0x20] sm:$0xff]
  %v16 = vld [vmem:[%s0 + $0x28] sm:$0xff]
  %v17 = vld [vmem:[%s0 + $0x30] sm:$0xff]
  %v18 = vld [vmem:[%s0 + $0x38] sm:$0xff]
  %v19 = vld [vmem:[%s0 + $0x40] sm:$0xff]
  %v20 = vld [vmem:[%s0 + $0x48] sm:$0xff]
  %v21 = vld [vmem:[%s0 + $0x50] sm:$0xff]
  %v22 = vld [vmem:[%s0 + $0x58] sm:$0xff]
  %v23 = vld [vmem:[%s0 + $0x60] sm:$0xff]
  %v24 = vld [vmem:[%s0 + $0x68] sm:$0xff]
  %v25 = vld [vmem:[%s0 + $0x70] sm:$0xff]
  %v26 = vld [vmem:[%s0 + $0x78] sm:$0xff]
  %v27 = vld [vmem:[%s0 + $0x80] sm:$0xff]
  %v28 = vld [vmem:[%s0 + $0x88] sm:$0xff]
  %v29 = vld [vmem:[%s0 + $0x90] sm:$0xff]
  %v30 = vld [vmem:[%s0 + $0x98] sm:$0xff]
  %v31 = vld [vmem:[%s0 + $0xa0] sm:$0xff]
  %v32 = vld [vmem:[%s0 + $0xa8] sm:$0xff]
  %v33 = vld [vmem:[%s0 + $0xb0] sm:$0xff]
  %v34 = vld [vmem:[%s0 + $0xb8] sm:$0xff]
  %v35 = vld [vmem:[%s0 + $0xc0] sm:$0xff]
  %v36 = vld [vmem:[%s1 + $0x18] sm:$0x1]
  %v37 = vld [vmem:[%s1 + $0x20] sm:$0x1]
  %v38 = vld [vmem:[%s1 + $0x28] sm:$0x1]
  %v39 = vld [vmem:[%s1 + $0x30] sm:$0x1]
  %41 = vset.pattern.permute.xlu0 0
  %42 = vperm.xlu0 %41, %v11
  %v43 = vpop.permute.xlu0 %42
  %46 = vset.pattern.permute.xlu0 0
  %47 = vperm.xlu0 %46, %v12
  %v48 = vpop.permute.xlu0 %47
  %51 = vset.pattern.permute.xlu0 0
  %52 = vperm.xlu0 %51, %v13
  %v53 = vpop.permute.xlu0 %52
  %56 = vset.pattern.permute.xlu0 0
  %57 = vperm.xlu0 %56, %v14
  %v58 = vpop.permute.xlu0 %57
  %61 = vset.pattern.permute.xlu0 0
  %62 = vperm.xlu0 %61, %v15
  %v63 = vpop.permute.xlu0 %62
  %66 = vset.pattern.permute.xlu0 0
  %67 = vperm.xlu0 %66, %v16
  %v68 = vpop.permute.xlu0 %67
  %71 = vset.pattern.permute.xlu0 0
  %72 = vperm.xlu0 %71, %v17
  %v73 = vpop.permute.xlu0 %72
  %76 = vset.pattern.permute.xlu0 0
  %77 = vperm.xlu0 %76, %v18
  %v78 = vpop.permute.xlu0 %77
  %81 = vset.pattern.permute.xlu0 0
  %82 = vperm.xlu0 %81, %v19
  %v83 = vpop.permute.xlu0 %82
  %86 = vset.pattern.permute.xlu0 0
  %87 = vperm.xlu0 %86, %v20
  %v88 = vpop.permute.xlu0 %87
  %91 = vset.pattern.permute.xlu0 0
  %92 = vperm.xlu0 %91, %v21
  %v93 = vpop.permute.xlu0 %92
  %96 = vset.pattern.permute.xlu0 0
  %97 = vperm.xlu0 %96, %v22
  %v98 = vpop.permute.xlu0 %97
  %101 = vset.pattern.permute.xlu0 0
  %102 = vperm.xlu0 %101, %v23
  %v103 = vpop.permute.xlu0 %102
  %106 = vset.pattern.permute.xlu0 0
  %107 = vperm.xlu0 %106, %v24
  %v108 = vpop.permute.xlu0 %107
  %111 = vset.pattern.permute.xlu0 0
  %112 = vperm.xlu0 %111, %v25
  %v113 = vpop.permute.xlu0 %112
  %116 = vset.pattern.permute.xlu0 0
  %117 = vperm.xlu0 %116, %v26
  %v118 = vpop.permute.xlu0 %117
  %121 = vset.pattern.permute.xlu0 0
  %122 = vperm.xlu0 %121, %v27
  %v123 = vpop.permute.xlu0 %122
  %126 = vset.pattern.permute.xlu0 0
  %127 = vperm.xlu0 %126, %v28
  %v128 = vpop.permute.xlu0 %127
  %131 = vset.pattern.permute.xlu0 0
  %132 = vperm.xlu0 %131, %v29
  %v133 = vpop.permute.xlu0 %132
  %136 = vset.pattern.permute.xlu0 0
  %137 = vperm.xlu0 %136, %v30
  %v138 = vpop.permute.xlu0 %137
  %141 = vset.pattern.permute.xlu0 0
  %142 = vperm.xlu0 %141, %v31
  %v143 = vpop.permute.xlu0 %142
  %146 = vset.pattern.permute.xlu0 0
  %147 = vperm.xlu0 %146, %v32
  %v148 = vpop.permute.xlu0 %147
  %151 = vset.pattern.permute.xlu0 0
  %152 = vperm.xlu0 %151, %v33
  %v153 = vpop.permute.xlu0 %152
  %156 = vset.pattern.permute.xlu0 0
  %157 = vperm.xlu0 %156, %v34
  %v158 = vpop.permute.xlu0 %157
  %161 = vset.pattern.permute.xlu0 0
  %162 = vperm.xlu0 %161, %v35
  %v163 = vpop.permute.xlu0 %162
  %v165 = vlaneseq
  %v166 = vshrl.u32 %v165, 7
  %v167 = vsub.s32 0, %v166
  %v168 = vrot.slane %v36, %v167
  %v169 = vmul.f32 %v43, %v168
  %v170 = vmul.f32 %v48, %v168
  %v171 = vmul.f32 %v53, %v168
  %v172 = vmul.f32 %v58, %v168
  %v173 = vmul.f32 %v63, %v168
  %v174 = vmul.f32 %v68, %v168
  %v175 = vmul.f32 %v73, %v168
  %v176 = vmul.f32 %v78, %v168
  %v177 = vmul.f32 %v83, %v168
  %v178 = vmul.f32 %v88, %v168
  %v179 = vmul.f32 %v93, %v168
  %v180 = vmul.f32 %v98, %v168
  %v181 = vmul.f32 %v103, %v168
  %v182 = vmul.f32 %v108, %v168
  %v183 = vmul.f32 %v113, %v168
  %v184 = vmul.f32 %v118, %v168
  %v185 = vmul.f32 %v123, %v168
  %v186 = vmul.f32 %v128, %v168
  %v187 = vmul.f32 %v133, %v168
  %v188 = vmul.f32 %v138, %v168
  %v189 = vmul.f32 %v143, %v168
  %v190 = vmul.f32 %v148, %v168
  %v191 = vmul.f32 %v153, %v168
  %v192 = vmul.f32 %v158, %v168
  %v193 = vmul.f32 %v163, %v168
  %v194 = vlaneseq
  %v195 = vshrl.u32 %v194, 7
  %v196 = vsub.s32 0, %v195
  %v197 = vrot.slane %v37, %v196
  %v198 = vadd.f32 %v169, %v197
  %v199 = vadd.f32 %v170, %v197
  %v200 = vadd.f32 %v171, %v197
  %v201 = vadd.f32 %v172, %v197
  %v202 = vadd.f32 %v173, %v197
  %v203 = vadd.f32 %v174, %v197
  %v204 = vadd.f32 %v175, %v197
  %v205 = vadd.f32 %v176, %v197
  %v206 = vadd.f32 %v177, %v197
  %v207 = vadd.f32 %v178, %v197
  %v208 = vadd.f32 %v179, %v197
  %v209 = vadd.f32 %v180, %v197
  %v210 = vadd.f32 %v181, %v197
  %v211 = vadd.f32 %v182, %v197
  %v212 = vadd.f32 %v183, %v197
  %v213 = vadd.f32 %v184, %v197
  %v214 = vadd.f32 %v185, %v197
  %v215 = vadd.f32 %v186, %v197
  %v216 = vadd.f32 %v187, %v197
  %v217 = vadd.f32 %v188, %v197
  %v218 = vadd.f32 %v189, %v197
  %v219 = vadd.f32 %v190, %v197
  %v220 = vadd.f32 %v191, %v197
  %v221 = vadd.f32 %v192, %v197
  %v222 = vadd.f32 %v193, %v197
  %v223 = vmax.f32 %v198, 0.0
  %v224 = vmax.f32 %v199, 0.0
  %v225 = vmax.f32 %v200, 0.0
  %v226 = vmax.f32 %v201, 0.0
  %v227 = vmax.f32 %v202, 0.0
  %v228 = vmax.f32 %v203, 0.0
  %v229 = vmax.f32 %v204, 0.0
  %v230 = vmax.f32 %v205, 0.0
  %v231 = vmax.f32 %v206, 0.0
  %v232 = vmax.f32 %v207, 0.0
  %v233 = vmax.f32 %v208, 0.0
  %v234 = vmax.f32 %v209, 0.0
  %v235 = vmax.f32 %v210, 0.0
  %v236 = vmax.f32 %v211, 0.0
  %v237 = vmax.f32 %v212, 0.0
  %v238 = vmax.f32 %v213, 0.0
  %v239 = vmax.f32 %v214, 0.0
  %v240 = vmax.f32 %v215, 0.0
  %v241 = vmax.f32 %v216, 0.0
  %v242 = vmax.f32 %v217, 0.0
  %v243 = vmax.f32 %v218, 0.0
  %v244 = vmax.f32 %v219, 0.0
  %v245 = vmax.f32 %v220, 0.0
  %v246 = vmax.f32 %v221, 0.0
  %v247 = vmax.f32 %v222, 0.0
  %v248 = vld [vmem:[%s1] sm:$0xff]
  %v249 = vld [vmem:[%s1 + $0x8] sm:$0xff]
  %v250 = vld [vmem:[%s1 + $0x10] sm:$0xff]
  %v251 = vld [vmem:[%s1 + $0x18] sm:$0xff]
  %v252 = vld [vmem:[%s1 + $0x20] sm:$0xff]
  %v253 = vld [vmem:[%s1 + $0x28] sm:$0xff]
  %v254 = vld [vmem:[%s1 + $0x30] sm:$0xff]
  %v255 = vld [vmem:[%s1 + $0x38] sm:$0xff]
  %v256 = vld [vmem:[%s1 + $0x40] sm:$0xff]
  %v257 = vld [vmem:[%s1 + $0x48] sm:$0xff]
  %v258 = vld [vmem:[%s1 + $0x50] sm:$0xff]
  %v259 = vld [vmem:[%s1 + $0x58] sm:$0xff]
  %v260 = vld [vmem:[%s1 + $0x60] sm:$0xff]
  %v261 = vld [vmem:[%s1 + $0x68] sm:$0xff]
  %v262 = vld [vmem:[%s1 + $0x70] sm:$0xff]
  %v263 = vld [vmem:[%s1 + $0x78] sm:$0xff]
  %v264 = vlaneseq
  %v265 = vshrl.u32 %v264, 7
  %v266 = vsub.s32 0, %v265
  %v267 = vrot.slane %v38, %v266
  %268 = vmatprep.subr.mxu0 0.0
  %269 = vmatpush1.msra.mxu0 %v248
  %270 = vmatprep.subr.mxu0 0.0
  %271 = vmatpush1.msra.mxu0 %v249
  %272 = vmatprep.subr.mxu0 0.0
  %273 = vmatpush1.msra.mxu0 %v250
  %274 = vmatprep.subr.mxu0 0.0
  %275 = vmatpush1.msra.mxu0 %v251
  %276 = vmatprep.subr.mxu0 0.0
  %277 = vmatpush1.msra.mxu0 %v252
  %278 = vmatprep.subr.mxu0 0.0
  %279 = vmatpush1.msra.mxu0 %v253
  %280 = vmatprep.subr.mxu0 0.0
  %281 = vmatpush1.msra.mxu0 %v254
  %282 = vmatprep.subr.mxu0 0.0
  %283 = vmatpush1.msra.mxu0 %v255
  %284 = vmatprep.subr.mxu0 0.0
  %285 = vmatpush1.msra.mxu0 %v256
  %286 = vmatprep.subr.mxu0 0.0
  %287 = vmatpush1.msra.mxu0 %v257
  %288 = vmatprep.subr.mxu0 0.0
  %289 = vmatpush1.msra.mxu0 %v258
  %290 = vmatprep.subr.mxu0 0.0
  %291 = vmatpush1.msra.mxu0 %v259
  %292 = vmatprep.subr.mxu0 0.0
  %293 = vmatpush1.msra.mxu0 %v260
  %294 = vmatprep.subr.mxu0 0.0
  %295 = vmatpush1.msra.mxu0 %v261
  %296 = vmatprep.subr.mxu0 0.0
  %297 = vmatpush1.msra.mxu0 %v262
  %298 = vmatprep.subr.mxu0 0.0
  %299 = vmatpush1.msra.mxu0 %v263
  %300 = vmatprep.subr.mxu0 0.0
  %301 = vmatpush1.msra.mxu0 0.0
  %302 = vmatprep.subr.mxu0 0.0
  %303 = vmatpush1.msra.mxu0 0.0
  %304 = vmatprep.subr.mxu0 0.0
  %305 = vmatpush1.msra.mxu0 0.0
  %306 = vmatprep.subr.mxu0 0.0
  %307 = vmatpush1.msra.mxu0 0.0
  %308 = vmatprep.subr.mxu0 0.0
  %309 = vmatpush1.msra.mxu0 0.0
  %310 = vmatprep.subr.mxu0 0.0
  %311 = vmatpush1.msra.mxu0 0.0
  %312 = vmatprep.subr.mxu0 0.0
  %313 = vmatpush1.msra.mxu0 0.0
  %314 = vmatprep.subr.mxu0 0.0
  %315 = vmatpush1.msra.mxu0 0.0
  %316 = vmatprep.subr.mxu0 0.0
  %317 = vmatpush1.msra.mxu0 0.0
  %318 = vmatprep.subr.mxu0 0.0
  %319 = vmatpush1.msra.mxu0 0.0
  %320 = vmatprep.subr.mxu0 0.0
  %321 = vmatpush1.msra.mxu0 0.0
  %322 = vmatprep.subr.mxu0 0.0
  %323 = vmatpush1.msra.mxu0 0.0
  %324 = vmatprep.subr.mxu0 0.0
  %325 = vmatpush1.msra.mxu0 0.0
  %326 = vmatprep.subr.mxu0 0.0
  %327 = vmatpush1.msra.mxu0 0.0
  %328 = vmatprep.subr.mxu0 0.0
  %329 = vmatpush1.msra.mxu0 0.0
  %330 = vmatprep.subr.mxu0 0.0
  %331 = vmatpush1.msra.mxu0 0.0
  %332 = vmatprep.mubr.f32.mxu0 0.0
  %333 = vmatmul.mubr.f32.gmra.mrb[0].mxu0 %v223
  %v334 = vpop.f32.mrb[0].mxu0
  %v335 = vadd.f32 %v267, %v334
  %v336 = vpop.f32.mrb[0].mxu0
  %337 = vmatprep.mubr.f32.mxu0 0.0
  %338 = vmatmul.mubr.f32.gmra.mrb[0].mxu0 %v224
  %v339 = vpop.f32.mrb[0].mxu0
  %v340 = vadd.f32 %v267, %v339
  %v341 = vpop.f32.mrb[0].mxu0
  %342 = vmatprep.mubr.f32.mxu0 0.0
  %343 = vmatmul.mubr.f32.gmra.mrb[0].mxu0 %v225
  %v344 = vpop.f32.mrb[0].mxu0
  %v345 = vadd.f32 %v267, %v344
  %v346 = vpop.f32.mrb[0].mxu0
  %347 = vmatprep.mubr.f32.mxu0 0.0
  %348 = vmatmul.mubr.f32.gmra.mrb[0].mxu0 %v226
  %v349 = vpop.f32.mrb[0].mxu0
  %v350 = vadd.f32 %v267, %v349
  %v351 = vpop.f32.mrb[0].mxu0
  %352 = vmatprep.mubr.f32.mxu0 0.0
  %353 = vmatmul.mubr.f32.gmra.mrb[0].mxu0 %v227
  %v354 = vpop.f32.mrb[0].mxu0
  %v355 = vadd.f32 %v267, %v354
  %v356 = vpop.f32.mrb[0].mxu0
  %357 = vmatprep.mubr.f32.mxu0 0.0
  %358 = vmatmul.mubr.f32.gmra.mrb[0].mxu0 %v228
  %v359 = vpop.f32.mrb[0].mxu0
  %v360 = vadd.f32 %v267, %v359
  %v361 = vpop.f32.mrb[0].mxu0
  %362 = vmatprep.mubr.f32.mxu0 0.0
  %363 = vmatmul.mubr.f32.gmra.mrb[0].mxu0 %v229
  %v364 = vpop.f32.mrb[0].mxu0
  %v365 = vadd.f32 %v267, %v364
  %v366 = vpop.f32.mrb[0].mxu0
  %367 = vmatprep.mubr.f32.mxu0 0.0
  %368 = vmatmul.mubr.f32.gmra.mrb[0].mxu0 %v230
  %v369 = vpop.f32.mrb[0].mxu0
  %v370 = vadd.f32 %v267, %v369
  %v371 = vpop.f32.mrb[0].mxu0
  %372 = vmatprep.mubr.f32.mxu0 0.0
  %373 = vmatmul.mubr.f32.gmra.mrb[0].mxu0 %v231
  %v374 = vpop.f32.mrb[0].mxu0
  %v375 = vadd.f32 %v267, %v374
  %v376 = vpop.f32.mrb[0].mxu0
  %377 = vmatprep.mubr.f32.mxu0 0.0
  %378 = vmatmul.mubr.f32.gmra.mrb[0].mxu0 %v232
  %v379 = vpop.f32.mrb[0].mxu0
  %v380 = vadd.f32 %v267, %v379
  %v381 = vpop.f32.mrb[0].mxu0
  %382 = vmatprep.mubr.f32.mxu0 0.0
  %383 = vmatmul.mubr.f32.gmra.mrb[0].mxu0 %v233
  %v384 = vpop.f32.mrb[0].mxu0
  %v385 = vadd.f32 %v267, %v384
  %v386 = vpop.f32.mrb[0].mxu0
  %387 = vmatprep.mubr.f32.mxu0 0.0
  %388 = vmatmul.mubr.f32.gmra.mrb[0].mxu0 %v234
  %v389 = vpop.f32.mrb[0].mxu0
  %v390 = vadd.f32 %v267, %v389
  %v391 = vpop.f32.mrb[0].mxu0
  %392 = vmatprep.mubr.f32.mxu0 0.0
  %393 = vmatmul.mubr.f32.gmra.mrb[0].mxu0 %v235
  %v394 = vpop.f32.mrb[0].mxu0
  %v395 = vadd.f32 %v267, %v394
  %v396 = vpop.f32.mrb[0].mxu0
  %397 = vmatprep.mubr.f32.mxu0 0.0
  %398 = vmatmul.mubr.f32.gmra.mrb[0].mxu0 %v236
  %v399 = vpop.f32.mrb[0].mxu0
  %v400 = vadd.f32 %v267, %v399
  %v401 = vpop.f32.mrb[0].mxu0
  %402 = vmatprep.mubr.f32.mxu0 0.0
  %403 = vmatmul.mubr.f32.gmra.mrb[0].mxu0 %v237
  %v404 = vpop.f32.mrb[0].mxu0
  %v405 = vadd.f32 %v267, %v404
  %v406 = vpop.f32.mrb[0].mxu0
  %407 = vmatprep.mubr.f32.mxu0 0.0
  %408 = vmatmul.mubr.f32.gmra.mrb[0].mxu0 %v238
  %v409 = vpop.f32.mrb[0].mxu0
  %v410 = vadd.f32 %v267, %v409
  %v411 = vpop.f32.mrb[0].mxu0
  %412 = vmatprep.mubr.f32.mxu0 0.0
  %413 = vmatmul.mubr.f32.gmra.mrb[0].mxu0 %v239
  %v414 = vpop.f32.mrb[0].mxu0
  %v415 = vadd.f32 %v267, %v414
  %v416 = vpop.f32.mrb[0].mxu0
  %417 = vmatprep.mubr.f32.mxu0 0.0
  %418 = vmatmul.mubr.f32.gmra.mrb[0].mxu0 %v240
  %v419 = vpop.f32.mrb[0].mxu0
  %v420 = vadd.f32 %v267, %v419
  %v421 = vpop.f32.mrb[0].mxu0
  %422 = vmatprep.mubr.f32.mxu0 0.0
  %423 = vmatmul.mubr.f32.gmra.mrb[0].mxu0 %v241
  %v424 = vpop.f32.mrb[0].mxu0
  %v425 = vadd.f32 %v267, %v424
  %v426 = vpop.f32.mrb[0].mxu0
  %427 = vmatprep.mubr.f32.mxu0 0.0
  %428 = vmatmul.mubr.f32.gmra.mrb[0].mxu0 %v242
  %v429 = vpop.f32.mrb[0].mxu0
  %v430 = vadd.f32 %v267, %v429
  %v431 = vpop.f32.mrb[0].mxu0
  %432 = vmatprep.mubr.f32.mxu0 0.0
  %433 = vmatmul.mubr.f32.gmra.mrb[0].mxu0 %v243
  %v434 = vpop.f32.mrb[0].mxu0
  %v435 = vadd.f32 %v267, %v434
  %v436 = vpop.f32.mrb[0].mxu0
  %437 = vmatprep.mubr.f32.mxu0 0.0
  %438 = vmatmul.mubr.f32.gmra.mrb[0].mxu0 %v244
  %v439 = vpop.f32.mrb[0].mxu0
  %v440 = vadd.f32 %v267, %v439
  %v441 = vpop.f32.mrb[0].mxu0
  %442 = vmatprep.mubr.f32.mxu0 0.0
  %443 = vmatmul.mubr.f32.gmra.mrb[0].mxu0 %v245
  %v444 = vpop.f32.mrb[0].mxu0
  %v445 = vadd.f32 %v267, %v444
  %v446 = vpop.f32.mrb[0].mxu0
  %447 = vmatprep.mubr.f32.mxu0 0.0
  %448 = vmatmul.mubr.f32.gmra.mrb[0].mxu0 %v246
  %v449 = vpop.f32.mrb[0].mxu0
  %v450 = vadd.f32 %v267, %v449
  %v451 = vpop.f32.mrb[0].mxu0
  %452 = vmatprep.mubr.f32.mxu0 0.0
  %453 = vmatmul.mubr.f32.gmra.mrb[0].mxu0 %v247
  %v454 = vpop.f32.mrb[0].mxu0
  %v455 = vadd.f32 %v267, %v454
  %v456 = vpop.f32.mrb[0].mxu0
  %457 = vdwg.mxu0
  %v458 = vmax.f32 %v335, 0.0
  %v459 = vmax.f32 %v340, 0.0
  %v460 = vmax.f32 %v345, 0.0
  %v461 = vmax.f32 %v350, 0.0
  %v462 = vmax.f32 %v355, 0.0
  %v463 = vmax.f32 %v360, 0.0
  %v464 = vmax.f32 %v365, 0.0
  %v465 = vmax.f32 %v370, 0.0
  %v466 = vmax.f32 %v375, 0.0
  %v467 = vmax.f32 %v380, 0.0
  %v468 = vmax.f32 %v385, 0.0
  %v469 = vmax.f32 %v390, 0.0
  %v470 = vmax.f32 %v395, 0.0
  %v471 = vmax.f32 %v400, 0.0
  %v472 = vmax.f32 %v405, 0.0
  %v473 = vmax.f32 %v410, 0.0
  %v474 = vmax.f32 %v415, 0.0
  %v475 = vmax.f32 %v420, 0.0
  %v476 = vmax.f32 %v425, 0.0
  %v477 = vmax.f32 %v430, 0.0
  %v478 = vmax.f32 %v435, 0.0
  %v479 = vmax.f32 %v440, 0.0
  %v480 = vmax.f32 %v445, 0.0
  %v481 = vmax.f32 %v450, 0.0
  %v482 = vmax.f32 %v455, 0.0
  %v483 = vlaneseq
  %v484 = vshrl.u32 %v483, 7
  %v485 = vsub.s32 0, %v484
  %v486 = vrot.slane %v39, %v485
  %v487 = vmul.f32 %v458, %v486
  %v488 = vmul.f32 %v459, %v486
  %v489 = vmul.f32 %v460, %v486
  %v490 = vmul.f32 %v461, %v486
  %v491 = vmul.f32 %v462, %v486
  %v492 = vmul.f32 %v463, %v486
  %v493 = vmul.f32 %v464, %v486
  %v494 = vmul.f32 %v465, %v486
  %v495 = vmul.f32 %v466, %v486
  %v496 = vmul.f32 %v467, %v486
  %v497 = vmul.f32 %v468, %v486
  %v498 = vmul.f32 %v469, %v486
  %v499 = vmul.f32 %v470, %v486
  %v500 = vmul.f32 %v471, %v486
  %v501 = vmul.f32 %v472, %v486
  %v502 = vmul.f32 %v473, %v486
  %v503 = vmul.f32 %v474, %v486
  %v504 = vmul.f32 %v475, %v486
  %v505 = vmul.f32 %v476, %v486
  %v506 = vmul.f32 %v477, %v486
  %v507 = vmul.f32 %v478, %v486
  %v508 = vmul.f32 %v479, %v486
  %v509 = vmul.f32 %v480, %v486
  %v510 = vmul.f32 %v481, %v486
  %v511 = vmul.f32 %v482, %v486
  %512 = vadd.xlane.f32.xlu0 %v487
  %v513 = vpop.xlane.xlu0 %512
  %514 = vadd.xlane.f32.xlu0 %v488
  %v515 = vpop.xlane.xlu0 %514
  %516 = vadd.xlane.f32.xlu0 %v489
  %v517 = vpop.xlane.xlu0 %516
  %518 = vadd.xlane.f32.xlu0 %v490
  %v519 = vpop.xlane.xlu0 %518
  %520 = vadd.xlane.f32.xlu0 %v491
  %v521 = vpop.xlane.xlu0 %520
  %522 = vadd.xlane.f32.xlu0 %v492
  %v523 = vpop.xlane.xlu0 %522
  %524 = vadd.xlane.f32.xlu0 %v493
  %v525 = vpop.xlane.xlu0 %524
  %526 = vadd.xlane.f32.xlu0 %v494
  %v527 = vpop.xlane.xlu0 %526
  %528 = vadd.xlane.f32.xlu0 %v495
  %v529 = vpop.xlane.xlu0 %528
  %530 = vadd.xlane.f32.xlu0 %v496
  %v531 = vpop.xlane.xlu0 %530
  %532 = vadd.xlane.f32.xlu0 %v497
  %v533 = vpop.xlane.xlu0 %532
  %534 = vadd.xlane.f32.xlu0 %v498
  %v535 = vpop.xlane.xlu0 %534
  %536 = vadd.xlane.f32.xlu0 %v499
  %v537 = vpop.xlane.xlu0 %536
  %538 = vadd.xlane.f32.xlu0 %v500
  %v539 = vpop.xlane.xlu0 %538
  %540 = vadd.xlane.f32.xlu0 %v501
  %v541 = vpop.xlane.xlu0 %540
  %542 = vadd.xlane.f32.xlu0 %v502
  %v543 = vpop.xlane.xlu0 %542
  %544 = vadd.xlane.f32.xlu0 %v503
  %v545 = vpop.xlane.xlu0 %544
  %546 = vadd.xlane.f32.xlu0 %v504
  %v547 = vpop.xlane.xlu0 %546
  %548 = vadd.xlane.f32.xlu0 %v505
  %v549 = vpop.xlane.xlu0 %548
  %550 = vadd.xlane.f32.xlu0 %v506
  %v551 = vpop.xlane.xlu0 %550
  %552 = vadd.xlane.f32.xlu0 %v507
  %v553 = vpop.xlane.xlu0 %552
  %554 = vadd.xlane.f32.xlu0 %v508
  %v555 = vpop.xlane.xlu0 %554
  %556 = vadd.xlane.f32.xlu0 %v509
  %v557 = vpop.xlane.xlu0 %556
  %558 = vadd.xlane.f32.xlu0 %v510
  %v559 = vpop.xlane.xlu0 %558
  %560 = vadd.xlane.f32.xlu0 %v511
  %v561 = vpop.xlane.xlu0 %560
  %vm562 = vcmask 7168
  %563 = vst.msk [vmem:[%s2] sm:$0xff] %vm562, %v513
  %564 = vst.msk [vmem:[%s2 + $0x8] sm:$0xff] %vm562, %v515
  %565 = vst.msk [vmem:[%s2 + $0x10] sm:$0xff] %vm562, %v517
  %566 = vst.msk [vmem:[%s2 + $0x18] sm:$0xff] %vm562, %v519
  %567 = vst.msk [vmem:[%s2 + $0x20] sm:$0xff] %vm562, %v521
  %568 = vst.msk [vmem:[%s2 + $0x28] sm:$0xff] %vm562, %v523
  %569 = vst.msk [vmem:[%s2 + $0x30] sm:$0xff] %vm562, %v525
  %570 = vst.msk [vmem:[%s2 + $0x38] sm:$0xff] %vm562, %v527
  %571 = vst.msk [vmem:[%s2 + $0x40] sm:$0xff] %vm562, %v529
  %572 = vst.msk [vmem:[%s2 + $0x48] sm:$0xff] %vm562, %v531
  %573 = vst.msk [vmem:[%s2 + $0x50] sm:$0xff] %vm562, %v533
  %574 = vst.msk [vmem:[%s2 + $0x58] sm:$0xff] %vm562, %v535
  %575 = vst.msk [vmem:[%s2 + $0x60] sm:$0xff] %vm562, %v537
  %576 = vst.msk [vmem:[%s2 + $0x68] sm:$0xff] %vm562, %v539
  %577 = vst.msk [vmem:[%s2 + $0x70] sm:$0xff] %vm562, %v541
  %578 = vst.msk [vmem:[%s2 + $0x78] sm:$0xff] %vm562, %v543
  %579 = vst.msk [vmem:[%s2 + $0x80] sm:$0xff] %vm562, %v545
  %580 = vst.msk [vmem:[%s2 + $0x88] sm:$0xff] %vm562, %v547
  %581 = vst.msk [vmem:[%s2 + $0x90] sm:$0xff] %vm562, %v549
  %582 = vst.msk [vmem:[%s2 + $0x98] sm:$0xff] %vm562, %v551
  %583 = vst.msk [vmem:[%s2 + $0xa0] sm:$0xff] %vm562, %v553
  %584 = vst.msk [vmem:[%s2 + $0xa8] sm:$0xff] %vm562, %v555
  %585 = vst.msk [vmem:[%s2 + $0xb0] sm:$0xff] %vm562, %v557
  %586 = vst.msk [vmem:[%s2 + $0xb8] sm:$0xff] %vm562, %v559
  %587 = vst.msk [vmem:[%s2 + $0xc0] sm:$0xff] %vm562, %v561
  // Predicated region
  $region10: #{tpu_custom_call.1} parent=0 // pred_check
    _
  $region11: #{tpu_custom_call.1} parent=0 // pred_check_branch
    %589 = sbr.rel (0) target = $region13
  $region12: #{tpu_custom_call.1} parent=0 // pred_region
    _
  $region13: #{tpu_custom_call.1} parent=0 // pred_fallthru
    _
  // Predicated region
  $region14: #{tpu_custom_call.1} parent=0 // pred_check
    _
  $region15: #{tpu_custom_call.1} parent=0 // pred_check_branch
    %591 = sbr.rel (0) target = $region17
  $region16: #{tpu_custom_call.1} parent=0 // pred_region
    _
  $region17: #{tpu_custom_call.1} parent=0 // pred_fallthru
    _

</llo_original>
